<compile_context>
chip_gen: v6e
topology: v6e:2x2x1
jax: 0.10.0
libtpu: 0.0.40
codegen_flags: <defaults>
</compile_context>

<pallas_src>
import functools

import jax
import jax.numpy as jnp
from jax.experimental import pallas as pl
from jax.experimental.pallas import tpu as pltpu


def _round_up(a, b):
    return (a + b - 1) // b * b


# ----------------------------------------------------------------------------
# Kernels
# ----------------------------------------------------------------------------
def _lossav_train_kernel(x_ref, wd_ref, bd_ref, lab_ref,
                         score_ref, plabel_ref, part_ref,
                         *, inv_r, n_valid):
    """One batch tile of the training branch (all outputs lane-dense)."""
    i = pl.program_id(0)
    tn = plabel_ref.shape[-1]

    # delta = logit_1 - logit_0, lane-dense: (1, C) contracted with (tn, C) -> (1, tn)
    delta = jax.lax.dot_general(
        wd_ref[...], x_ref[...],
        dimension_numbers=(((1,), (1,)), ((), ())),
        preferred_element_type=jnp.float32) + bd_ref[...]              # (1, tn)

    # predScore = softmax(logits): column 1 == sigmoid(delta), column 0 == 1 - p1.
    p1 = 1.0 / (1.0 + jnp.exp(-delta))                                 # (1, tn)
    sub2 = jax.lax.broadcasted_iota(jnp.int32, (2, tn), 0)
    p1b = jnp.broadcast_to(p1, (2, tn))
    score_ref[...] = jnp.where(sub2 == 1, p1b, 1.0 - p1b).astype(score_ref.dtype)

    plab = jnp.round(p1)                         # torch.round (half-to-even)
    plabel_ref[...] = plab.astype(plabel_ref.dtype)

    labels = lab_ref[...]                        # (1, tn) float32 in {0, 1}

    # BCE on softmax(logits / r)[:, 1] == sigmoid(delta / r).
    # log(sigmoid(z)) = z - softplus(z); log(1 - sigmoid(z)) = -softplus(z);
    # nn.BCELoss clamps the log terms at -100.
    dr = delta * inv_r
    sp = jnp.maximum(dr, 0.0) + jnp.log(1.0 + jnp.exp(-jnp.abs(dr)))   # softplus(dr)
    logp = jnp.maximum(dr - sp, -100.0)
    log1mp = jnp.maximum(-sp, -100.0)
    bce = -(labels * logp + (1.0 - labels) * log1mp)                   # (1, tn)

    # Mask the padded tail, reduce this tile to partial sums.
    lane = jax.lax.broadcasted_iota(jnp.int32, (1, tn), 1)
    valid = (i * tn + lane) < n_valid
    loss_p = jnp.sum(jnp.where(valid, bce, 0.0))
    corr_p = jnp.sum(jnp.where(valid & (plab == labels), 1.0, 0.0))

    # Per-tile partials: sublane 0 = loss sum, sublane 1 = correct count.
    sub = jax.lax.broadcasted_iota(jnp.int32, (8, 128), 0)
    part_ref[...] = jnp.where(sub == 0, loss_p,
                              jnp.where(sub == 1, corr_p, 0.0))


def _lossav_infer_kernel(x_ref, w1_ref, b1_ref, score_ref):
    # predScore = logits[:, 1] = x @ w1 + b1, produced lane-dense as (1, tn).
    score = jax.lax.dot_general(
        w1_ref[...], x_ref[...],
        dimension_numbers=(((1,), (1,)), ((), ())),
        preferred_element_type=jnp.float32) + b1_ref[...]
    score_ref[...] = score.astype(score_ref.dtype)


# ----------------------------------------------------------------------------
# Wrapper
# ----------------------------------------------------------------------------
def lossav_forward(x, fc_weight, fc_bias, labels=None, r=1.0, *, tn=None):
    """Pallas implementation of lossAV.forward.

    x         : (N, 1, C) or (N, C)
    fc_weight : (2, C)  (PyTorch nn.Linear layout)
    fc_bias   : (2,)
    labels    : optional (N,) integer labels
    """
    if x.ndim == 3:
        x = x[:, 0, :]                    # x.squeeze(1)
    n, c = x.shape

    # --- batch tile: as large as a conservative VMEM budget allows -----------
    itemsize = jnp.dtype(x.dtype).itemsize
    if tn is None:
        budget = 12 * 1024 * 1024         # x double-buffered inside ~12 MiB
        tn = (budget // (2 * c * itemsize)) // 128 * 128
        tn = max(128, min(2048, int(tn)))
    tn = max(128, (int(tn) // 128) * 128)
    tn = min(tn, _round_up(n, 128))
    n_pad = _round_up(n, tn)
    num_tiles = n_pad // tn

    if n_pad != n:
        x = jnp.pad(x, ((0, n_pad - n), (0, 0)))

    # Scoped-VMEM hint: double-buffered blocks + headroom, kept below v7x's 64 MiB.
    est = 2 * (tn * c * itemsize + c * itemsize + 4 * (4 * tn + 2 + 8 * 128))
    vmem_limit = int(min(max(2 * est, 16 * 1024 * 1024), 48 * 1024 * 1024))

    x_spec = pl.BlockSpec((tn, c), lambda i: (i, 0))

    if labels is None:
        # Inference branch: predScore = logits[:, 1].view(-1)
        # TODO(synk): PyTorch returns .detach().cpu().numpy(); we return a device array.
        w1 = fc_weight[1:2, :].astype(x.dtype)                    # (1, C)
        b1 = fc_bias[1].astype(jnp.float32).reshape(1, 1)         # (1, 1)
        score_t = pl.pallas_call(
            _lossav_infer_kernel,
            out_shape=jax.ShapeDtypeStruct((1, n_pad), jnp.float32),
            grid_spec=pltpu.PrefetchScalarGridSpec(
                num_scalar_prefetch=0,
                grid=(num_tiles,),
                in_specs=[x_spec,
                          pl.BlockSpec((1, c), lambda i: (0, 0)),
                          pl.BlockSpec((1, 1), lambda i: (0, 0))],
                out_specs=pl.BlockSpec((1, tn), lambda i: (0, i)),
            ),
            compiler_params=pltpu.CompilerParams(
                dimension_semantics=("parallel",),
                vmem_limit_bytes=vmem_limit),
        )(x, w1, b1)
        return score_t[0, :n]

    # --- training branch ------------------------------------------------------
    wd = (fc_weight[1:2, :] - fc_weight[0:1, :]).astype(x.dtype)   # (1, C)
    bd = (fc_bias[1] - fc_bias[0]).astype(jnp.float32).reshape(1, 1)
    lab_t = labels.astype(jnp.float32).reshape(1, n)               # lane-dense labels
    if n_pad != n:
        lab_t = jnp.pad(lab_t, ((0, 0), (0, n_pad - n)))

    kernel = functools.partial(_lossav_train_kernel,
                               inv_r=1.0 / float(r), n_valid=int(n))
    score_t, plabel_t, partials = pl.pallas_call(
        kernel,
        out_shape=(
            jax.ShapeDtypeStruct((2, n_pad), jnp.float32),           # predScore^T
            jax.ShapeDtypeStruct((1, n_pad), jnp.float32),           # predLabel
            jax.ShapeDtypeStruct((num_tiles, 8, 128), jnp.float32),  # partial sums
        ),
        grid_spec=pltpu.PrefetchScalarGridSpec(
            num_scalar_prefetch=0,
            grid=(num_tiles,),
            in_specs=[x_spec,
                      pl.BlockSpec((1, c), lambda i: (0, 0)),
                      pl.BlockSpec((1, 1), lambda i: (0, 0)),
                      pl.BlockSpec((1, tn), lambda i: (0, i))],
            out_specs=(
                pl.BlockSpec((2, tn), lambda i: (0, i)),
                pl.BlockSpec((1, tn), lambda i: (0, i)),
                pl.BlockSpec((None, 8, 128), lambda i: (i, 0, 0)),
            ),
        ),
        compiler_params=pltpu.CompilerParams(
            dimension_semantics=("parallel",),
            vmem_limit_bytes=vmem_limit),
    )(x, wd, bd, lab_t)

    nloss = jnp.sum(partials[:, 0, 0]) / n        # BCELoss mean reduction (true N)
    correct = jnp.sum(partials[:, 1, 0])
    pred_score = score_t[:, :n].T                 # (N, 2)
    pred_label = plabel_t[0, :n]                  # (N,)
    return nloss, pred_score, pred_label, correct


# ----------------------------------------------------------------------------
# Pure-JAX reference (sanity check only)
# ----------------------------------------------------------------------------
def _reference(x, w, b, labels, r):
    x2 = x[:, 0, :]
    logits = jnp.dot(x2, w.T, precision=jax.lax.Precision.HIGHEST) + b
    p = jax.nn.softmax(logits, axis=-1)
    p1r = jax.nn.softmax(logits / r, axis=-1)[:, 1]
    labf = labels.astype(jnp.float32)
    logp = jnp.maximum(jnp.log(p1r), -100.0)
    log1mp = jnp.maximum(jnp.log(1.0 - p1r), -100.0)
    nloss = jnp.mean(-(labf * logp + (1.0 - labf) * log1mp))
    plab = jnp.round(p)[:, 1]
    correct = jnp.sum((plab == labf).astype(jnp.float32))
    return nloss, p, plab, correct


# ----------------------------------------------------------------------------
if __name__ == "__main__":
    N, C = 200, 128          # small shapes; N not a tile multiple -> exercises masking
    R = 1.3
    key = jax.random.PRNGKey(0)
    kx, kw, kb, kl = jax.random.split(key, 4)

    x = jax.random.normal(kx, (N, 1, C), dtype=jnp.float32)        # (N, 1, C)
    fc_weight = jax.random.normal(kw, (2, C), dtype=jnp.float32) * 0.1
    fc_bias = jax.random.normal(kb, (2,), dtype=jnp.float32) * 0.1
    labels = jax.random.bernoulli(kl, 0.5, (N,)).astype(jnp.int32)

    # Training branch (labels provided); tn=128 forces a multi-tile grid + padding.
    nloss, pred_score, pred_label, correct = jax.block_until_ready(
        lossav_forward(x, fc_weight, fc_bias, labels, r=R, tn=128))

    # Inference branch (labels=None), default (large) tile.
    infer_score = jax.block_until_ready(
        lossav_forward(x, fc_weight, fc_bias, None))

    # Sanity check against the pure-JAX reference.
    ref_nloss, ref_p, ref_plab, ref_corr = _reference(x, fc_weight, fc_bias, labels, R)
    assert jnp.allclose(nloss, ref_nloss, atol=1e-4)
    assert jnp.allclose(pred_score, ref_p, atol=1e-4)
    assert jnp.allclose(pred_label, ref_plab)
    assert jnp.allclose(correct, ref_corr)
    ref_infer = (jnp.dot(x[:, 0, :], fc_weight.T,
                         precision=jax.lax.Precision.HIGHEST) + fc_bias)[:, 1]
    assert jnp.allclose(infer_score, ref_infer, atol=1e-4)

    print("KERNEL_OK")
</pallas_src>

<mosaic_0001>
module attributes {stable_mosaic.version = 11 : i64} {
  func.func @_lossav_train_kernel(%arg0: i32, %arg1: memref<128x128xf32, #tpu.memory_space<vmem>>, %arg2: memref<1x128xf32, #tpu.memory_space<vmem>>, %arg3: memref<1x1xf32, #tpu.memory_space<vmem>>, %arg4: memref<1x128xf32, #tpu.memory_space<vmem>>, %arg5: memref<2x128xf32, #tpu.memory_space<vmem>>, %arg6: memref<1x128xf32, #tpu.memory_space<vmem>>, %arg7: memref<1x8x128xf32, #tpu.memory_space<vmem>>) attributes {dimension_semantics = [#tpu.dimension_semantics<parallel>], iteration_bounds = array<i64: 2>, scalar_prefetch = 0 : i64, scratch_operands = 0 : i64, tpu.core_type = #tpu.core_type<tc>, window_params = [{transform_indices = @transform_0, window_bounds = array<i64: 128, 128>}, {pipeline_mode = #tpu.pipeline_mode<synchronous>, transform_indices = @transform_1, window_bounds = array<i64: 1, 128>}, {pipeline_mode = #tpu.pipeline_mode<synchronous>, transform_indices = @transform_2, window_bounds = array<i64: 1, 1>}, {transform_indices = @transform_3, window_bounds = array<i64: 1, 128>}, {transform_indices = @transform_4, window_bounds = array<i64: 2, 128>}, {transform_indices = @transform_5, window_bounds = array<i64: 1, 128>}, {transform_indices = @transform_6, window_bounds = array<i64: 1, 8, 128>}]} {
    %c0 = arith.constant 0 : index
    %c0_0 = arith.constant 0 : index
    %0 = vector.load %arg2[%c0, %c0_0] : memref<1x128xf32, #tpu.memory_space<vmem>>, vector<1x128xf32>
    %c0_1 = arith.constant 0 : index
    %c0_2 = arith.constant 0 : index
    %1 = vector.load %arg1[%c0_1, %c0_2] : memref<128x128xf32, #tpu.memory_space<vmem>>, vector<128x128xf32>
    %cst = arith.constant dense<0.000000e+00> : vector<1x128xf32>
    %2 = tpu.matmul %0, %1, %cst {dimension_numbers = #tpu.dot_dimension_numbers<[1], [1], [0], [0], [0, 0, 1, 0], [], []>} : vector<1x128xf32>, vector<128x128xf32>, vector<1x128xf32> -> vector<1x128xf32>
    %c0_3 = arith.constant 0 : index
    %c0_4 = arith.constant 0 : index
    %3 = vector.load %arg3[%c0_3, %c0_4] : memref<1x1xf32, #tpu.memory_space<vmem>>, vector<1x1xf32>
    %4 = vector.broadcast %3 : vector<1x1xf32> to vector<1x128xf32>
    %5 = arith.addf %2, %4 : vector<1x128xf32>
    %cst_5 = arith.constant 0.000000e+00 : f32
    %6 = vector.broadcast %cst_5 : f32 to vector<1x128xf32>
    %7 = arith.subf %6, %5 : vector<1x128xf32>
    %8 = math.exp %7 : vector<1x128xf32>
    %cst_6 = arith.constant 1.000000e+00 : f32
    %9 = vector.broadcast %cst_6 : f32 to vector<1x128xf32>
    %10 = arith.addf %9, %8 : vector<1x128xf32>
    %cst_7 = arith.constant 1.000000e+00 : f32
    %11 = vector.broadcast %cst_7 : f32 to vector<1x128xf32>
    %12 = arith.divf %11, %10 : vector<1x128xf32>
    %13 = tpu.iota {dimensions = array<i32: 0>} : vector<2x128xi32>
    %14 = vector.shape_cast %12 : vector<1x128xf32> to vector<1x128xf32>
    %15 = vector.broadcast %14 : vector<1x128xf32> to vector<2x128xf32>
    %c1_i32 = arith.constant 1 : i32
    %16 = vector.broadcast %c1_i32 : i32 to vector<2x128xi32>
    %17 = arith.cmpi eq, %13, %16 : vector<2x128xi32>
    %cst_8 = arith.constant 1.000000e+00 : f32
    %18 = vector.broadcast %cst_8 : f32 to vector<2x128xf32>
    %19 = arith.subf %18, %15 : vector<2x128xf32>
    %20 = arith.select %17, %15, %19 : vector<2x128xi1>, vector<2x128xf32>
    %c0_9 = arith.constant 0 : index
    %c0_10 = arith.constant 0 : index
    %21 = vector.load %arg5[%c0_9, %c0_10] : memref<2x128xf32, #tpu.memory_space<vmem>>, vector<2x128xf32>
    tpu.vector_store %arg5[%c0_9, %c0_10], %20 {strides = array<i32>} : memref<2x128xf32, #tpu.memory_space<vmem>>, vector<2x128xf32>,
    %22 = math.roundeven %12 : vector<1x128xf32>
    %c0_11 = arith.constant 0 : index
    %c0_12 = arith.constant 0 : index
    %23 = vector.load %arg6[%c0_11, %c0_12] : memref<1x128xf32, #tpu.memory_space<vmem>>, vector<1x128xf32>
    tpu.vector_store %arg6[%c0_11, %c0_12], %22 {strides = array<i32>} : memref<1x128xf32, #tpu.memory_space<vmem>>, vector<1x128xf32>,
    %c0_13 = arith.constant 0 : index
    %c0_14 = arith.constant 0 : index
    %24 = vector.load %arg4[%c0_13, %c0_14] : memref<1x128xf32, #tpu.memory_space<vmem>>, vector<1x128xf32>
    %cst_15 = arith.constant 0.769230782 : f32
    %25 = vector.broadcast %cst_15 : f32 to vector<1x128xf32>
    %26 = arith.mulf %5, %25 : vector<1x128xf32>
    %cst_16 = arith.constant 0.000000e+00 : f32
    %27 = vector.broadcast %cst_16 : f32 to vector<1x128xf32>
    %28 = arith.maximumf %26, %27 : vector<1x128xf32>
    %29 = math.absf %26 : vector<1x128xf32>
    %cst_17 = arith.constant 0.000000e+00 : f32
    %30 = vector.broadcast %cst_17 : f32 to vector<1x128xf32>
    %31 = arith.subf %30, %29 : vector<1x128xf32>
    %32 = math.exp %31 : vector<1x128xf32>
    %cst_18 = arith.constant 1.000000e+00 : f32
    %33 = vector.broadcast %cst_18 : f32 to vector<1x128xf32>
    %34 = arith.addf %33, %32 : vector<1x128xf32>
    %35 = math.log %34 : vector<1x128xf32>
    %36 = arith.addf %28, %35 : vector<1x128xf32>
    %37 = arith.subf %26, %36 : vector<1x128xf32>
    %cst_19 = arith.constant -1.000000e+02 : f32
    %38 = vector.broadcast %cst_19 : f32 to vector<1x128xf32>
    %39 = arith.maximumf %37, %38 : vector<1x128xf32>
    %cst_20 = arith.constant 0.000000e+00 : f32
    %40 = vector.broadcast %cst_20 : f32 to vector<1x128xf32>
    %41 = arith.subf %40, %36 : vector<1x128xf32>
    %cst_21 = arith.constant -1.000000e+02 : f32
    %42 = vector.broadcast %cst_21 : f32 to vector<1x128xf32>
    %43 = arith.maximumf %41, %42 : vector<1x128xf32>
    %44 = arith.mulf %24, %39 : vector<1x128xf32>
    %cst_22 = arith.constant 1.000000e+00 : f32
    %45 = vector.broadcast %cst_22 : f32 to vector<1x128xf32>
    %46 = arith.subf %45, %24 : vector<1x128xf32>
    %47 = arith.mulf %46, %43 : vector<1x128xf32>
    %48 = arith.addf %44, %47 : vector<1x128xf32>
    %cst_23 = arith.constant 0.000000e+00 : f32
    %49 = vector.broadcast %cst_23 : f32 to vector<1x128xf32>
    %50 = arith.subf %49, %48 : vector<1x128xf32>
    %51 = tpu.iota {dimensions = array<i32: 1>} : vector<1x128xi32>
    %c128_i32 = arith.constant 128 : i32
    %52 = arith.muli %arg0, %c128_i32 : i32
    %53 = vector.broadcast %52 : i32 to vector<1x128xi32>
    %54 = arith.addi %53, %51 : vector<1x128xi32>
    %c200_i32 = arith.constant 200 : i32
    %55 = vector.broadcast %c200_i32 : i32 to vector<1x128xi32>
    %56 = arith.cmpi slt, %54, %55 : vector<1x128xi32>
    %cst_24 = arith.constant 0.000000e+00 : f32
    %57 = vector.broadcast %cst_24 : f32 to vector<1x128xf32>
    %58 = arith.select %56, %50, %57 : vector<1x128xi1>, vector<1x128xf32>
    %59 = vector.shape_cast %58 : vector<1x128xf32> to vector<1x1x128xf32>
    %cst_25 = arith.constant dense<0.000000e+00> : vector<1xf32>
    %60 = vector.multi_reduction <add>, %59, %cst_25 [1, 2] : vector<1x1x128xf32> to vector<1xf32>
    %61 = vector.shape_cast %60 : vector<1xf32> to vector<1x1x1xf32>
    %62 = vector.extract %61[0, 0, 0] : f32 from vector<1x1x1xf32>
    %63 = arith.cmpf oeq, %22, %24 : vector<1x128xf32>
    %64 = arith.andi %56, %63 : vector<1x128xi1>
    %cst_26 = arith.constant 1.000000e+00 : f32
    %cst_27 = arith.constant 0.000000e+00 : f32
    %65 = vector.broadcast %cst_26 : f32 to vector<1x128xf32>
    %66 = vector.broadcast %cst_27 : f32 to vector<1x128xf32>
    %67 = arith.select %64, %65, %66 : vector<1x128xi1>, vector<1x128xf32>
    %68 = vector.shape_cast %67 : vector<1x128xf32> to vector<1x1x128xf32>
    %cst_28 = arith.constant dense<0.000000e+00> : vector<1xf32>
    %69 = vector.multi_reduction <add>, %68, %cst_28 [1, 2] : vector<1x1x128xf32> to vector<1xf32>
    %70 = vector.shape_cast %69 : vector<1xf32> to vector<1x1x1xf32>
    %71 = vector.extract %70[0, 0, 0] : f32 from vector<1x1x1xf32>
    %72 = tpu.iota {dimensions = array<i32: 0>} : vector<8x128xi32>
    %c0_i32 = arith.constant 0 : i32
    %73 = vector.broadcast %c0_i32 : i32 to vector<8x128xi32>
    %74 = arith.cmpi eq, %72, %73 : vector<8x128xi32>
    %c1_i32_29 = arith.constant 1 : i32
    %75 = vector.broadcast %c1_i32_29 : i32 to vector<8x128xi32>
    %76 = arith.cmpi eq, %72, %75 : vector<8x128xi32>
    %cst_30 = arith.constant 0.000000e+00 : f32
    %77 = vector.broadcast %71 : f32 to vector<8x128xf32>
    %78 = vector.broadcast %cst_30 : f32 to vector<8x128xf32>
    %79 = arith.select %76, %77, %78 : vector<8x128xi1>, vector<8x128xf32>
    %80 = vector.broadcast %62 : f32 to vector<8x128xf32>
    %81 = arith.select %74, %80, %79 : vector<8x128xi1>, vector<8x128xf32>
    %c0_31 = arith.constant 0 : index
    %c0_32 = arith.constant 0 : index
    %c0_33 = arith.constant 0 : index
    %82 = vector.load %arg7[%c0_31, %c0_32, %c0_33] : memref<1x8x128xf32, #tpu.memory_space<vmem>>, vector<1x8x128xf32>
    %83 = vector.shape_cast %82 : vector<1x8x128xf32> to vector<8x128xf32>
    %84 = vector.shape_cast %81 : vector<8x128xf32> to vector<1x8x128xf32>
    tpu.vector_store %arg7[%c0_31, %c0_32, %c0_33], %84 {strides = array<i32>} : memref<1x8x128xf32, #tpu.memory_space<vmem>>, vector<1x8x128xf32>,
    return
  }
  func.func @transform_0(%arg0: i32) -> (i32, i32) {
    %c0_i32 = arith.constant 0 : i32
    %c0_i32_0 = arith.constant 0 : i32
    return %arg0, %c0_i32 : i32, i32
  }
  func.func @transform_1(%arg0: i32) -> (i32, i32) {
    %c0_i32 = arith.constant 0 : i32
    %c0_i32_0 = arith.constant 0 : i32
    %c0_i32_1 = arith.constant 0 : i32
    return %c0_i32, %c0_i32_0 : i32, i32
  }
  func.func @transform_2(%arg0: i32) -> (i32, i32) {
    %c0_i32 = arith.constant 0 : i32
    %c0_i32_0 = arith.constant 0 : i32
    %c0_i32_1 = arith.constant 0 : i32
    return %c0_i32, %c0_i32_0 : i32, i32
  }
  func.func @transform_3(%arg0: i32) -> (i32, i32) {
    %c0_i32 = arith.constant 0 : i32
    %c0_i32_0 = arith.constant 0 : i32
    return %c0_i32, %arg0 : i32, i32
  }
  func.func @transform_4(%arg0: i32) -> (i32, i32) {
    %c0_i32 = arith.constant 0 : i32
    %c0_i32_0 = arith.constant 0 : i32
    return %c0_i32, %arg0 : i32, i32
  }
  func.func @transform_5(%arg0: i32) -> (i32, i32) {
    %c0_i32 = arith.constant 0 : i32
    %c0_i32_0 = arith.constant 0 : i32
    return %c0_i32, %arg0 : i32, i32
  }
  func.func @transform_6(%arg0: i32) -> (i32, i32, i32) {
    %c0_i32 = arith.constant 0 : i32
    %c0_i32_0 = arith.constant 0 : i32
    %c0_i32_1 = arith.constant 0 : i32
    return %arg0, %c0_i32, %c0_i32_0 : i32, i32, i32
  }
}

</mosaic_0001>

<llo_original>
// kernel: tpu_custom_call.1
$region0: #{tpu_custom_call.1}
  #allocation0 [shape = 'u32[]', space=smem, size = 0x4, offset = 0x4, fixed_abs, tag = 'smem constant byte address 0x4 - core index']
  #allocation1 [shape = 'u32[144,128]{1,0:T(1,128)}', space=vmem, size = 0x12000, scoped, tag = 'internal scratch']
  #allocation2 [shape = 'f32[1,1]{1,0:T(1,128)S(1)}', space=vmem, size = 0x200, scoped, tag = 'scoped memory for tpu_custom_call.1']
  %s0 = inlined_call_operand.hbm [shape: f32[256,128], index: 0, kind: input, shape index: {}]
  %s1 = inlined_call_operand.vmem [shape: f32[1,128], index: 1, kind: input, shape index: {}]
  %s2 = inlined_call_operand.<no memory space> [shape: f32[1,1], index: 2, kind: input, shape index: {}]
  %s3 = inlined_call_operand.vmem [shape: f32[1,256], index: 3, kind: input, shape index: {}]
  %s4 = inlined_call_operand.hbm [shape: f32[2,256], index: 4, kind: output, shape index: {0}]
  %s5 = inlined_call_operand.hbm [shape: f32[1,256], index: 5, kind: output, shape index: {1}]
  %s6 = inlined_call_operand.hbm [shape: f32[2,8,128], index: 6, kind: output, shape index: {2}]
  %7 = xla_tuple %s4, %s5, %s6
  %s8 = sld [smem:[#allocation0]]
  $region69: #{tpu_custom_call.1} parent=0
    _
  %s10 = ssub.s32 1, %s8
  %s11 = scalar_select 0, %s10, %s8
  %v12 = vstv %s2
  %13 = vst [vmem:[#allocation2] sm:$0x1] %v12
  $region1: #{tpu_custom_call.1} parent=0
    #allocation3 [shape = 'u8[131072]{0}', space=vmem, size = 0x20000, scoped, tag = 'input window, operand 0']
    #allocation4 [shape = 's32[2]{0}', space=sflag, size = 0x8, scoped, tag = 'scoped memory for tpu_custom_call.1']
    #allocation5 [shape = 's32[2]{0}', space=sflag, size = 0x8, scoped, tag = 'scoped memory for tpu_custom_call.1']
    #allocation6 [shape = 'u8[2048]{0}', space=vmem, size = 0x800, scoped, tag = 'output window, operand 0']
    #allocation7 [shape = 'u8[1024]{0}', space=vmem, size = 0x400, scoped, tag = 'output window, operand 1']
    #allocation8 [shape = 's32[2]{0}', space=sflag, size = 0x8, scoped, tag = 'scoped memory for tpu_custom_call.1']
    #allocation9 [shape = 'u8[8192]{0}', space=vmem, size = 0x2000, scoped, tag = 'output window, operand 2']
    %14 = vsyncpa [#allocation4], 0
    %s15 = scalar_lea.sflag [#allocation4], 1
    %16 = vsyncpa %s15, 0
    %17 = vsyncpa [#allocation5], 0
    %s18 = scalar_lea.sflag [#allocation5], 1
    %19 = vsyncpa %s18, 0
    %20 = vsyncpa [#allocation8], 0
    %s21 = scalar_lea.sflag [#allocation8], 1
    %22 = vsyncpa %s21, 0
    loop: start=0, step=1, limit=4
    $region2: #{tpu_custom_call.1} parent=1 // loop_pre_header
      _
    $region3: #{tpu_custom_call.1} parent=1 // loop_header
      %s24 = sphi 0, %s28
      %p25 = scmp.ge.s32.totalorder %s24, 4
      %s34 = sphi 0, %s36
      %s37 = sphi 0, %s34
      %s38 = sphi 0, %s37
      %s54 = sphi 0, %s38
      %s58 = sphi 0, %s58
      %s60 = sphi 0, %s58
      %s61 = sphi 0, %s60
      %s75 = sphi 0, %s61
      %s79 = sphi 0, %s79
      %s81 = sphi 0, %s79
      %s82 = sphi 0, %s81
      %s96 = sphi 0, %s82
      %s102 = sphi 0, %s104
      %s105 = sphi 0, %s102
      %s106 = sphi 0, %s105
      %s122 = sphi 0, %s106
      %s128 = sphi 0, %s130
      %s131 = sphi 0, %s128
      %s132 = sphi 0, %s131
      %s148 = sphi 0, %s132
      %s154 = sphi 0, %s156
      %s157 = sphi 0, %s154
      %s158 = sphi 0, %s157
      %s174 = sphi 0, %s158
      %s180 = sphi 0, %s182
      %s183 = sphi 0, %s180
      %s184 = sphi 0, %s183
      %s200 = sphi 0, %s184
    $region4: #{tpu_custom_call.1} parent=1 // loop_header_branch
      %27 = sbr.rel (%p25) target = $region8
    $region5: #{tpu_custom_call.1} parent=1 // loop_body
      %s29 = ssub.s32 %s24, 1
      %s30 = ssub.s32 %s24, 2
      %s31 = sadd.s32 %s24, 1
      %s32 = ssub.s32 %s24, %s31
      %p33 = scmp.eq.s32.totalorder %s32, 0
      %s35 = sadd.s32 %s34, 1
      %s36 = scalar_select %p33, %s34, %s35
      %p39 = pneg %p33
      %p40 = scmp.eq.s32.totalorder %s24, 1
      %p41 = por %p39, %p40
      %p42 = scmp.ne.s32.totalorder %s34, %s37
      %p43 = scmp.eq.s32.totalorder %s24, 0
      %p44 = por %p42, %p43
      %p45 = scmp.ne.s32.totalorder %s34, %s37
      %p46 = scmp.eq.s32.totalorder %s29, 1
      %p47 = por %p45, %p46
      %p48 = scmp.ne.s32.totalorder %s37, %s38
      %p49 = scmp.eq.s32.totalorder %s29, 0
      %p50 = por %p48, %p49
      %p51 = scmp.ne.s32.totalorder %s37, %s38
      %p52 = scmp.eq.s32.totalorder %s30, 1
      %p53 = por %p51, %p52
      %p55 = scmp.ne.s32.totalorder %s38, %s54
      %p56 = scmp.eq.s32.totalorder %s30, 0
      %p57 = por %p55, %p56
      %s59 = sadd.s32 %s58, 1
      %p62 = scmp.eq.s32.totalorder %s24, 1
      %p63 = scmp.ne.s32.totalorder %s58, %s60
      %p64 = scmp.eq.s32.totalorder %s24, 0
      %p65 = por %p63, %p64
      %p66 = scmp.ne.s32.totalorder %s58, %s60
      %p67 = scmp.eq.s32.totalorder %s29, 1
      %p68 = por %p66, %p67
      %p69 = scmp.ne.s32.totalorder %s60, %s61
      %p70 = scmp.eq.s32.totalorder %s29, 0
      %p71 = por %p69, %p70
      %p72 = scmp.ne.s32.totalorder %s60, %s61
      %p73 = scmp.eq.s32.totalorder %s30, 1
      %p74 = por %p72, %p73
      %p76 = scmp.ne.s32.totalorder %s61, %s75
      %p77 = scmp.eq.s32.totalorder %s30, 0
      %p78 = por %p76, %p77
      %s80 = sadd.s32 %s79, 1
      %p83 = scmp.eq.s32.totalorder %s24, 1
      %p84 = scmp.ne.s32.totalorder %s79, %s81
      %p85 = scmp.eq.s32.totalorder %s24, 0
      %p86 = por %p84, %p85
      %p87 = scmp.ne.s32.totalorder %s79, %s81
      %p88 = scmp.eq.s32.totalorder %s29, 1
      %p89 = por %p87, %p88
      %p90 = scmp.ne.s32.totalorder %s81, %s82
      %p91 = scmp.eq.s32.totalorder %s29, 0
      %p92 = por %p90, %p91
      %p93 = scmp.ne.s32.totalorder %s81, %s82
      %p94 = scmp.eq.s32.totalorder %s30, 1
      %p95 = por %p93, %p94
      %p97 = scmp.ne.s32.totalorder %s82, %s96
      %p98 = scmp.eq.s32.totalorder %s30, 0
      %p99 = por %p97, %p98
      %s100 = ssub.s32 %s24, %s31
      %p101 = scmp.eq.s32.totalorder %s100, 0
      %s103 = sadd.s32 %s102, 1
      %s104 = scalar_select %p101, %s102, %s103
      %p107 = pneg %p101
      %p108 = scmp.eq.s32.totalorder %s24, 1
      %p109 = por %p107, %p108
      %p110 = scmp.ne.s32.totalorder %s102, %s105
      %p111 = scmp.eq.s32.totalorder %s24, 0
      %p112 = por %p110, %p111
      %p113 = scmp.ne.s32.totalorder %s102, %s105
      %p114 = scmp.eq.s32.totalorder %s29, 1
      %p115 = por %p113, %p114
      %p116 = scmp.ne.s32.totalorder %s105, %s106
      %p117 = scmp.eq.s32.totalorder %s29, 0
      %p118 = por %p116, %p117
      %p119 = scmp.ne.s32.totalorder %s105, %s106
      %p120 = scmp.eq.s32.totalorder %s30, 1
      %p121 = por %p119, %p120
      %p123 = scmp.ne.s32.totalorder %s106, %s122
      %p124 = scmp.eq.s32.totalorder %s30, 0
      %p125 = por %p123, %p124
      %s126 = ssub.s32 %s24, %s31
      %p127 = scmp.eq.s32.totalorder %s126, 0
      %s129 = sadd.s32 %s128, 1
      %s130 = scalar_select %p127, %s128, %s129
      %p133 = pneg %p127
      %p134 = scmp.eq.s32.totalorder %s24, 1
      %p135 = por %p133, %p134
      %p136 = scmp.ne.s32.totalorder %s128, %s131
      %p137 = scmp.eq.s32.totalorder %s24, 0
      %p138 = por %p136, %p137
      %p139 = scmp.ne.s32.totalorder %s128, %s131
      %p140 = scmp.eq.s32.totalorder %s29, 1
      %p141 = por %p139, %p140
      %p142 = scmp.ne.s32.totalorder %s131, %s132
      %p143 = scmp.eq.s32.totalorder %s29, 0
      %p144 = por %p142, %p143
      %p145 = scmp.ne.s32.totalorder %s131, %s132
      %p146 = scmp.eq.s32.totalorder %s30, 1
      %p147 = por %p145, %p146
      %p149 = scmp.ne.s32.totalorder %s132, %s148
      %p150 = scmp.eq.s32.totalorder %s30, 0
      %p151 = por %p149, %p150
      %s152 = ssub.s32 %s24, %s31
      %p153 = scmp.eq.s32.totalorder %s152, 0
      %s155 = sadd.s32 %s154, 1
      %s156 = scalar_select %p153, %s154, %s155
      %p159 = pneg %p153
      %p160 = scmp.eq.s32.totalorder %s24, 1
      %p161 = por %p159, %p160
      %p162 = scmp.ne.s32.totalorder %s154, %s157
      %p163 = scmp.eq.s32.totalorder %s24, 0
      %p164 = por %p162, %p163
      %p165 = scmp.ne.s32.totalorder %s154, %s157
      %p166 = scmp.eq.s32.totalorder %s29, 1
      %p167 = por %p165, %p166
      %p168 = scmp.ne.s32.totalorder %s157, %s158
      %p169 = scmp.eq.s32.totalorder %s29, 0
      %p170 = por %p168, %p169
      %p171 = scmp.ne.s32.totalorder %s157, %s158
      %p172 = scmp.eq.s32.totalorder %s30, 1
      %p173 = por %p171, %p172
      %p175 = scmp.ne.s32.totalorder %s158, %s174
      %p176 = scmp.eq.s32.totalorder %s30, 0
      %p177 = por %p175, %p176
      %s178 = ssub.s32 %s24, %s31
      %p179 = scmp.eq.s32.totalorder %s178, 0
      %s181 = sadd.s32 %s180, 1
      %s182 = scalar_select %p179, %s180, %s181
      %p185 = pneg %p179
      %p186 = scmp.eq.s32.totalorder %s24, 1
      %p187 = por %p185, %p186
      %p188 = scmp.ne.s32.totalorder %s180, %s183
      %p189 = scmp.eq.s32.totalorder %s24, 0
      %p190 = por %p188, %p189
      %p191 = scmp.ne.s32.totalorder %s180, %s183
      %p192 = scmp.eq.s32.totalorder %s29, 1
      %p193 = por %p191, %p192
      %p194 = scmp.ne.s32.totalorder %s183, %s184
      %p195 = scmp.eq.s32.totalorder %s29, 0
      %p196 = por %p194, %p195
      %p197 = scmp.ne.s32.totalorder %s183, %s184
      %p198 = scmp.eq.s32.totalorder %s30, 1
      %p199 = por %p197, %p198
      %p201 = scmp.ne.s32.totalorder %s184, %s200
      %p202 = scmp.eq.s32.totalorder %s30, 0
      %p203 = por %p201, %p202
      %p204 = scmp.le.s32.totalorder 1, %s24
      %p205 = scmp.lt.s32.totalorder %s24, 3
      %p206 = pnand %p204, %p205
      %p207 = pneg %p206
      // Predicated region
      $region9: #{tpu_custom_call.1} parent=5 // pred_check
        _
      $region10: #{tpu_custom_call.1} parent=5 // pred_check_branch
        %209 = sbr.rel (%p206) target = $region12
      $region11: #{tpu_custom_call.1} parent=5 // pred_region
        %s210 = ssub.s32 %s24, 1
        // Predicated region
        $region13: #{tpu_custom_call.1} parent=11 // pred_check
          %p211 = pneg %p71
        $region14: #{tpu_custom_call.1} parent=11 // pred_check_branch
          %213 = sbr.rel (%p211) target = $region16
        $region15: #{tpu_custom_call.1} parent=11 // pred_region
          _
        $region16: #{tpu_custom_call.1} parent=11 // pred_fallthru
          _
        // Predicated region
        $region17: #{tpu_custom_call.1} parent=11 // pred_check
          %p214 = pneg %p92
        $region18: #{tpu_custom_call.1} parent=11 // pred_check_branch
          %216 = sbr.rel (%p214) target = $region20
        $region19: #{tpu_custom_call.1} parent=11 // pred_region
          _
        $region20: #{tpu_custom_call.1} parent=11 // pred_fallthru
          _
      $region12: #{tpu_custom_call.1} parent=5 // pred_fallthru
        _
      %p217 = scmp.lt.s32.totalorder %s24, 2
      // Predicated region
      $region21: #{tpu_custom_call.1} parent=5 // pred_check
        %p218 = pneg %p217
      $region22: #{tpu_custom_call.1} parent=5 // pred_check_branch
        %220 = sbr.rel (%p218) target = $region24
      $region23: #{tpu_custom_call.1} parent=5 // pred_region
        // Predicated region
        $region25: #{tpu_custom_call.1} parent=23 // pred_check
          %p221 = pneg %p44
        $region26: #{tpu_custom_call.1} parent=23 // pred_check_branch
          %223 = sbr.rel (%p221) target = $region28
        $region27: #{tpu_custom_call.1} parent=23 // pred_region
          %s224 = sand.u32 %s34, 1
          %s225 = scalar_lea.sflag [#allocation4], %s224
          %s226 = sand.u32 %s34, 1
          %s227 = smul.addr %s226, 128
          %s228 = scalar_lea.vmem [#allocation3], %s227
          %s229 = smul.u32 16, %s24
          %s231 = ssub.s32 2048, 2048
          %232 = vsyncadd %s225, %s231
          %s233 = smul.addr %s229, 128
          %s234 = scalar_lea.hbm %s0, %s233
          %s235 = sshll.u32 %s228, 4
          %s236 = int_to_ptr.vmem [resolvable:$true] %s235
          %241 = dma.hbm_to_vmem [thread:$0]  %s234, 2048, %s236, %s225, 128, 128, 8
        $region28: #{tpu_custom_call.1} parent=23 // pred_fallthru
          _
        // Predicated region
        $region29: #{tpu_custom_call.1} parent=23 // pred_check
          %p242 = pneg %p112
        $region30: #{tpu_custom_call.1} parent=23 // pred_check_branch
          %244 = sbr.rel (%p242) target = $region32
        $region31: #{tpu_custom_call.1} parent=23 // pred_region
          %p245 = scmp.lt.s32.totalorder %s24, 1
          %s246 = scalar_select %p245, %s24, 1
          %s247 = scalar_lea.vmem %s3, %s246
        $region32: #{tpu_custom_call.1} parent=23 // pred_fallthru
          _
      $region24: #{tpu_custom_call.1} parent=5 // pred_fallthru
        _
      %p248 = scmp.le.s32.totalorder 1, %s24
      %p249 = scmp.lt.s32.totalorder %s24, 3
      %p250 = pnand %p248, %p249
      %p251 = pneg %p250
      // Predicated region
      $region33: #{tpu_custom_call.1} parent=5 // pred_check
        _
      $region34: #{tpu_custom_call.1} parent=5 // pred_check_branch
        %253 = sbr.rel (%p250) target = $region36
      $region35: #{tpu_custom_call.1} parent=5 // pred_region
        %s254 = ssub.s32 %s24, 1
        %s255 = sand.u32 %s37, 1
        %s256 = scalar_lea.sflag [#allocation4], %s255
        %s257 = sand.u32 %s37, 1
        %s258 = smul.addr %s257, 128
        %s259 = scalar_lea.vmem [#allocation3], %s258
        // Predicated region
        $region37: #{tpu_custom_call.1} parent=35 // pred_check
          %p260 = pneg %p50
        $region38: #{tpu_custom_call.1} parent=35 // pred_check_branch
          %262 = sbr.rel (%p260) target = $region40
        $region39: #{tpu_custom_call.1} parent=35 // pred_region
          %263 = dma.done %s256, 2048
        $region40: #{tpu_custom_call.1} parent=35 // pred_fallthru
          _
        %s264 = sand.u32 %s37, 1
        %s265 = scalar_lea.sflag [#allocation4], %s264
        %s266 = sand.u32 %s37, 1
        %s267 = smul.addr %s266, 128
        %s268 = scalar_lea.vmem [#allocation3], %s267
        %p269 = pneg %p50
        %p270 = pneg %p47
        %p271 = pneg %p71
        %p272 = pneg %p68
        %p273 = pneg %p92
        %p274 = pneg %p89
        %p275 = scmp.lt.s32.totalorder %s29, 1
        %s276 = scalar_select %p275, %s29, 1
        %s277 = scalar_lea.vmem %s3, %s276
        %p278 = pneg %p118
        %p279 = pneg %p115
        %p280 = pneg %p144
        %p281 = pneg %p141
        %s282 = sand.u32 %s131, 1
        %s283 = scalar_lea.sflag [#allocation5], %s282
        %s284 = sand.u32 %s131, 1
        %s285 = smul.addr %s284, 2
        %s286 = scalar_lea.vmem [#allocation6], %s285
        %p287 = pneg %p170
        %p288 = pneg %p167
        %s289 = sand.u32 %s29, 1
        %s290 = scalar_lea.sflag [#allocation8], %s289
        %s291 = sand.u32 %s157, 1
        %s292 = scalar_lea.vmem [#allocation7], %s291
        %p293 = pneg %p196
        %p294 = pneg %p193
        %s295 = sand.u32 %s29, 1
        %s296 = scalar_lea.sflag [#allocation8], %s295
        %s297 = sand.u32 %s183, 1
        %s298 = smul.addr %s297, 8
        %s299 = scalar_lea.vmem [#allocation9], %s298
        %s300 = smul.u32 16, %s29
        %p301 = scmp.lt.s32.totalorder %s29, 1
        %s302 = scalar_select %p301, %s29, 1
        %s303 = scalar_lea.vmem %s3, %s302
        %v304 = vld [vmem:[%s1] sm:$0x1]
        %v305 = vld [vmem:[%s259] sm:$0xff]
        %v306 = vld [vmem:[%s259 + $0x8] sm:$0xff]
        %v307 = vld [vmem:[%s259 + $0x10] sm:$0xff]
        %v308 = vld [vmem:[%s259 + $0x18] sm:$0xff]
        %v309 = vld [vmem:[%s259 + $0x20] sm:$0xff]
        %v310 = vld [vmem:[%s259 + $0x28] sm:$0xff]
        %v311 = vld [vmem:[%s259 + $0x30] sm:$0xff]
        %v312 = vld [vmem:[%s259 + $0x38] sm:$0xff]
        %v313 = vld [vmem:[%s259 + $0x40] sm:$0xff]
        %v314 = vld [vmem:[%s259 + $0x48] sm:$0xff]
        %v315 = vld [vmem:[%s259 + $0x50] sm:$0xff]
        %v316 = vld [vmem:[%s259 + $0x58] sm:$0xff]
        %v317 = vld [vmem:[%s259 + $0x60] sm:$0xff]
        %v318 = vld [vmem:[%s259 + $0x68] sm:$0xff]
        %v319 = vld [vmem:[%s259 + $0x70] sm:$0xff]
        %v320 = vld [vmem:[%s259 + $0x78] sm:$0xff]
        %v321 = vld [vmem:[#allocation2] sm:$0x1]
        %323 = vset.pattern.permute.xlu0 0
        %324 = vperm.xlu0 %323, %v321
        %v325 = vpop.permute.xlu0 %324
        %v327 = vlaneseq
        %v328 = vshrl.u32 %v327, 7
        %v329 = vsub.s32 0, %v328
        %v330 = vrot.slane %v325, %v329
        %331 = vmatprep.subr.mxu0 0.0
        %332 = vmatpush1.xpose.msra.mxu0 %v320
        %333 = vmatprep.subr.mxu0 0.0
        %334 = vmatpush1.xpose.msra.mxu0 %v319
        %335 = vmatprep.subr.mxu0 0.0
        %336 = vmatpush1.xpose.msra.mxu0 %v318
        %337 = vmatprep.subr.mxu0 0.0
        %338 = vmatpush1.xpose.msra.mxu0 %v317
        %339 = vmatprep.subr.mxu0 0.0
        %340 = vmatpush1.xpose.msra.mxu0 %v316
        %341 = vmatprep.subr.mxu0 0.0
        %342 = vmatpush1.xpose.msra.mxu0 %v315
        %343 = vmatprep.subr.mxu0 0.0
        %344 = vmatpush1.xpose.msra.mxu0 %v314
        %345 = vmatprep.subr.mxu0 0.0
        %346 = vmatpush1.xpose.msra.mxu0 %v313
        %347 = vmatprep.subr.mxu0 0.0
        %348 = vmatpush1.xpose.msra.mxu0 %v312
        %349 = vmatprep.subr.mxu0 0.0
        %350 = vmatpush1.xpose.msra.mxu0 %v311
        %351 = vmatprep.subr.mxu0 0.0
        %352 = vmatpush1.xpose.msra.mxu0 %v310
        %353 = vmatprep.subr.mxu0 0.0
        %354 = vmatpush1.xpose.msra.mxu0 %v309
        %355 = vmatprep.subr.mxu0 0.0
        %356 = vmatpush1.xpose.msra.mxu0 %v308
        %357 = vmatprep.subr.mxu0 0.0
        %358 = vmatpush1.xpose.msra.mxu0 %v307
        %359 = vmatprep.subr.mxu0 0.0
        %360 = vmatpush1.xpose.msra.mxu0 %v306
        %361 = vmatprep.subr.mxu0 0.0
        %362 = vmatpush1.xpose.msra.mxu0 %v305
        %363 = vmatprep.subr.mxu0 0.0
        %364 = vmatpush2.xpose.msra.mxu0 0.0
        %365 = vmatprep.subr.mxu0 0.0
        %366 = vmatpush2.xpose.msra.mxu0 0.0
        %367 = vmatprep.subr.mxu0 0.0
        %368 = vmatpush2.xpose.msra.mxu0 0.0
        %369 = vmatprep.subr.mxu0 0.0
        %370 = vmatpush2.xpose.msra.mxu0 0.0
        %371 = vmatprep.subr.mxu0 0.0
        %372 = vmatpush2.xpose.msra.mxu0 0.0
        %373 = vmatprep.subr.mxu0 0.0
        %374 = vmatpush2.xpose.msra.mxu0 0.0
        %375 = vmatprep.subr.mxu0 0.0
        %376 = vmatpush2.xpose.msra.mxu0 0.0
        %377 = vmatprep.subr.mxu0 0.0
        %378 = vmatpush2.xpose.msra.mxu0 0.0
        %379 = vmatprep.subr.mxu0 0.0
        %380 = vmatpush2.xpose.msra.mxu0 0.0
        %381 = vmatprep.subr.mxu0 0.0
        %382 = vmatpush2.xpose.msra.mxu0 0.0
        %383 = vmatprep.subr.mxu0 0.0
        %384 = vmatpush2.xpose.msra.mxu0 0.0
        %385 = vmatprep.subr.mxu0 0.0
        %386 = vmatpush2.xpose.msra.mxu0 0.0
        %387 = vmatprep.subr.mxu0 0.0
        %388 = vmatpush2.xpose.msra.mxu0 0.0
        %389 = vmatprep.subr.mxu0 0.0
        %390 = vmatpush2.xpose.msra.mxu0 0.0
        %391 = vmatprep.subr.mxu0 0.0
        %392 = vmatpush2.xpose.msra.mxu0 0.0
        %393 = vmatprep.subr.mxu0 0.0
        %394 = vmatpush2.xpose.msra.mxu0 0.0
        %395 = vmatprep.mubr.f32.mxu0 0.0
        %396 = vmatmul.mubr.f32.gmra.mxu0 %v304
        %v397 = vpop.f32.mrf.mxu0
        %v398 = vadd.f32 %v330, %v397
        %v399 = vpop.f32.mrf.mxu0
        %400 = vdwg.mxu0
        %v401 = vsub.f32 0.0, %v398
        %v402 = vmul.f32 %v401, 1.442695
        %v403 = vpow.pop %v402
        %v404 = vadd.f32 %v403, 1.0
        %v405 = vrcp.pop %v404
        %v406 = vmul.f32 1.0, %v405
        %v407 = vlaneseq
        %v408 = vshrl.u32 %v407, 7
        %v409 = vlaneseq
        %v410 = vshrl.u32 %v409, 7
        %v411 = vsub.s32 0, %v410
        %v412 = vrot.slane %v406, %v411
        %vm413 = vcmp.eq.s32.totalorder %v408, 1
        %v414 = vsub.f32 1.0, %v412
        %v415 = vsel %vm413, %v412, %v414
        %416 = vst [vmem:[%s286] sm:$0x3] %v415
        %v417 = vround.ne.pseudo %v406
        %418 = vst [vmem:[%s292] sm:$0x1] %v417
        %v419 = vld [vmem:[%s303] sm:$0x1]
        %v420 = vmul.f32 %v398, 0.7692308
        %v421 = vmax.f32 %v420, 0.0
        %v422 = vand.u32 2147483647, %v420
        %v423 = vsub.f32 0.0, %v422
        %v424 = vmul.f32 %v423, 1.442695
        %v425 = vpow.pop %v424
        %v426 = vadd.f32 %v425, 1.0
        %v427 = vlog2.pop %v426
        %v428 = vmul.f32 %v427, 0.6931472
        %v429 = vadd.f32 %v421, %v428
        %v430 = vsub.f32 %v420, %v429
        %v431 = vmax.f32 %v430, -100.0
        %v432 = vsub.f32 0.0, %v429
        %v433 = vmax.f32 %v432, -100.0
        %v434 = vmul.f32 %v419, %v431
        %v435 = vsub.f32 1.0, %v419
        %v436 = vmul.f32 %v435, %v433
        %v437 = vadd.f32 %v434, %v436
        %v438 = vsub.f32 0.0, %v437
        %v439 = vlaneseq
        %v440 = vand.u32 %v439, 127
        %s441 = smul.u32 %s29, 128
        %v442 = vstv %s441
        %v443 = vadd.s32 %v442, %v440
        %vm444 = vcmp.lt.s32.totalorder %v443, 200
        %v445 = vsel %vm444, %v438, 0.0
        %vm446 = vcmask 1040384
        %v447 = vsel %vm446, %v445, 0.0
        %448 = vadd.xlane.f32.xlu0 %v447
        %v449 = vpop.xlane.xlu0 %448
        %v450 = vrot.slane %v449, 4
        %v451 = vadd.f32 %v449, %v450
        %v452 = vrot.slane %v451, 2
        %v453 = vadd.f32 %v451, %v452
        %v454 = vrot.slane %v453, 1
        %v455 = vadd.f32 %v453, %v454
        %s456 = vtos %v455
        %vm457 = vcmp.eq.f32.partialorder %v417, %v419
        %vm458 = vmand %vm444, %vm457
        %v459 = vsel %vm458, 1.0, 0.0
        %v460 = vsel %vm446, %v459, 0.0
        %461 = vadd.xlane.f32.xlu0 %v460
        %v462 = vpop.xlane.xlu0 %461
        %v463 = vrot.slane %v462, 4
        %v464 = vadd.f32 %v462, %v463
        %v465 = vrot.slane %v464, 2
        %v466 = vadd.f32 %v464, %v465
        %v467 = vrot.slane %v466, 1
        %v468 = vadd.f32 %v466, %v467
        %s469 = vtos %v468
        %vm470 = vcmp.eq.s32.totalorder %v408, 0
        %v471 = vstv %s469
        %v472 = vsel %vm413, %v471, 0.0
        %v473 = vstv %s456
        %v474 = vsel %vm470, %v473, %v472
        %475 = vst [vmem:[%s299] sm:$0xff] %v474
        %s476 = sand.u32 %s131, 1
        %s477 = scalar_lea.sflag [#allocation5], %s476
        %s478 = sand.u32 %s131, 1
        %s479 = smul.addr %s478, 2
        %s480 = scalar_lea.vmem [#allocation6], %s479
        %s481 = sand.u32 %s29, 1
        %s482 = scalar_lea.sflag [#allocation8], %s481
        %s483 = sand.u32 %s157, 1
        %s484 = scalar_lea.vmem [#allocation7], %s483
        %s485 = sand.u32 %s29, 1
        %s486 = scalar_lea.sflag [#allocation8], %s485
        %s487 = sand.u32 %s183, 1
        %s488 = smul.addr %s487, 8
        %s489 = scalar_lea.vmem [#allocation9], %s488
        // Predicated region
        $region41: #{tpu_custom_call.1} parent=35 // pred_check
          %p490 = pneg %p141
        $region42: #{tpu_custom_call.1} parent=35 // pred_check_branch
          %492 = sbr.rel (%p490) target = $region44
        $region43: #{tpu_custom_call.1} parent=35 // pred_region
          %s494 = ssub.s32 32, 32
          %495 = vsyncadd %s477, %s494
          %s496 = smul.addr %s29, 32
          %s497 = scalar_lea.hbm %s4, %s496
          %s499 = sshll.u32 %s480, 4
          %s500 = int_to_ptr.vmem [resolvable:$true] %s499
          %502 = dma.vmem_to_hbm [thread:$0]  %s500, 32, %s497, %s477
        $region44: #{tpu_custom_call.1} parent=35 // pred_fallthru
          _
        // Predicated region
        $region45: #{tpu_custom_call.1} parent=35 // pred_check
          %p503 = pneg %p167
        $region46: #{tpu_custom_call.1} parent=35 // pred_check_branch
          %505 = sbr.rel (%p503) target = $region48
        $region47: #{tpu_custom_call.1} parent=35 // pred_region
          %s507 = ssub.s32 16, 16
          %508 = vsyncadd %s482, %s507
          %s509 = smul.addr %s29, 16
          %s510 = scalar_lea.hbm %s5, %s509
          %s512 = sshll.u32 %s484, 4
          %s513 = int_to_ptr.vmem [resolvable:$true] %s512
          %515 = dma.vmem_to_hbm [thread:$0]  %s513, 16, %s510, %s482
        $region48: #{tpu_custom_call.1} parent=35 // pred_fallthru
          _
        // Predicated region
        $region49: #{tpu_custom_call.1} parent=35 // pred_check
          %p516 = pneg %p193
        $region50: #{tpu_custom_call.1} parent=35 // pred_check_branch
          %518 = sbr.rel (%p516) target = $region52
        $region51: #{tpu_custom_call.1} parent=35 // pred_region
          %s520 = ssub.s32 128, 128
          %521 = vsyncadd %s486, %s520
          %s522 = smul.addr %s29, 128
          %s523 = scalar_lea.hbm %s6, %s522
          %s525 = sshll.u32 %s489, 4
          %s526 = int_to_ptr.vmem [resolvable:$true] %s525
          %528 = dma.vmem_to_hbm [thread:$0]  %s526, 128, %s523, %s486
        $region52: #{tpu_custom_call.1} parent=35 // pred_fallthru
          _
      $region36: #{tpu_custom_call.1} parent=5 // pred_fallthru
        _
      %p529 = scmp.le.s32.totalorder 2, %s24
      // Predicated region
      $region53: #{tpu_custom_call.1} parent=5 // pred_check
        %p530 = pneg %p529
      $region54: #{tpu_custom_call.1} parent=5 // pred_check_branch
        %532 = sbr.rel (%p530) target = $region56
      $region55: #{tpu_custom_call.1} parent=5 // pred_region
        %s533 = ssub.s32 %s24, 2
        // Predicated region
        $region57: #{tpu_custom_call.1} parent=55 // pred_check
          %p534 = pneg %p147
        $region58: #{tpu_custom_call.1} parent=55 // pred_check_branch
          %536 = sbr.rel (%p534) target = $region60
        $region59: #{tpu_custom_call.1} parent=55 // pred_region
          %s537 = sand.u32 %s132, 1
          %s538 = scalar_lea.sflag [#allocation5], %s537
          %s539 = sand.u32 %s132, 1
          %s540 = smul.addr %s539, 2
          %s541 = scalar_lea.vmem [#allocation6], %s540
          %542 = dma.done %s538, 32
        $region60: #{tpu_custom_call.1} parent=55 // pred_fallthru
          _
        // Predicated region
        $region61: #{tpu_custom_call.1} parent=55 // pred_check
          %p543 = pneg %p173
        $region62: #{tpu_custom_call.1} parent=55 // pred_check_branch
          %545 = sbr.rel (%p543) target = $region64
        $region63: #{tpu_custom_call.1} parent=55 // pred_region
          %s546 = sand.u32 %s30, 1
          %s547 = scalar_lea.sflag [#allocation8], %s546
          %s548 = sand.u32 %s158, 1
          %s549 = scalar_lea.vmem [#allocation7], %s548
          %550 = dma.done %s547, 16
        $region64: #{tpu_custom_call.1} parent=55 // pred_fallthru
          _
        // Predicated region
        $region65: #{tpu_custom_call.1} parent=55 // pred_check
          %p551 = pneg %p199
        $region66: #{tpu_custom_call.1} parent=55 // pred_check_branch
          %553 = sbr.rel (%p551) target = $region68
        $region67: #{tpu_custom_call.1} parent=55 // pred_region
          %s554 = sand.u32 %s30, 1
          %s555 = scalar_lea.sflag [#allocation8], %s554
          %s556 = sand.u32 %s184, 1
          %s557 = smul.addr %s556, 8
          %s558 = scalar_lea.vmem [#allocation9], %s557
          %559 = dma.done %s555, 128
        $region68: #{tpu_custom_call.1} parent=55 // pred_fallthru
          _
      $region56: #{tpu_custom_call.1} parent=5 // pred_fallthru
        _
    $region6: #{tpu_custom_call.1} parent=1 // loop_footer
      %s28 = sadd.s32 1, %s24
    $region7: #{tpu_custom_call.1} parent=1 // loop_footer_branch
      %23 = sbr.rel target = $region3
    $region8: #{tpu_custom_call.1} parent=1 // loop_exit
      _
    %560 = vsyncpa [#allocation4], 1
    %s561 = scalar_lea.sflag [#allocation4], 1
    %562 = vsyncpa %s561, 1
    %563 = vsyncpa [#allocation5], 1
    %s564 = scalar_lea.sflag [#allocation5], 1
    %565 = vsyncpa %s564, 1
    %566 = vsyncpa [#allocation8], 1
    %s567 = scalar_lea.sflag [#allocation8], 1
    %568 = vsyncpa %s567, 1

</llo_original>
